<compile_context>
chip_gen: v6e
topology: v6e:2x2x1
jax: 0.10.0
libtpu: 0.0.40
codegen_flags: <defaults>
</compile_context>

<pallas_src>
import jax
import jax.numpy as jnp
from jax.experimental import pallas as pl
from jax.experimental.pallas import tpu as pltpu

D = 64          # feature dim, fixed by MLP = Linear(64,64) -> Tanh -> Linear(64,64)
EPS = 0.0       # dgl GINConv default init_eps
LANE = 128
VMEM_BUDGET = 40 * 1024 * 1024   # conservative working-set budget (v7x: 64 MiB phys)


def _round_up(x, m):
    return ((x + m - 1) // m) * m


def _plan_tiles(np_):
    """Decide adjacency residency and the destination-column tile size TN."""
    adj_bytes = np_ * np_ * 2                 # bf16 adjacency
    carry_bytes = 2 * D * np_ * 2             # bf16 feature ping-pong scratch
    # keep full adjT resident across layers if (with pipeline buffering) it fits
    adj_resident = 2 * adj_bytes + carry_bytes <= VMEM_BUDGET

    def step_bytes(tn):
        out_db = 2 * D * tn * 4               # f32 output tile, double buffered
        temps = 6 * D * tn * 4                # f32 intermediates headroom
        if adj_resident:
            return 2 * adj_bytes + carry_bytes + out_db + temps
        adj_db = 2 * np_ * tn * 2             # streamed adjT column tile, double buf
        return adj_db + carry_bytes + out_db + temps

    tn = LANE
    cand = LANE
    while cand < np_:
        if np_ % cand == 0 and step_bytes(cand) <= VMEM_BUDGET:
            tn = cand
        cand *= 2
    if step_bytes(np_) <= VMEM_BUDGET:
        tn = np_                              # single column tile for small graphs
    return adj_resident, tn, step_bytes(tn)


def _make_gin_kernel(adj_resident, tn):
    def kernel(adjT_ref, xT_hbm, w1_ref, b1_ref, w2_ref, b2_ref, oT_ref,
               x_buf, dma_sem):
        """Grid = (layer, column_tile).

        adjT_ref: [Np, Np] (resident) or [Np, TN] (streamed) bf16 adjT[src, dst],
                  (1+eps) folded on the diagonal
        xT_hbm  : [D, Np] bf16 initial node features (transposed), HBM (pl.ANY)
        w1_ref  : [D, D]  bf16 layer-l first Linear weight (torch [out, in])
        b1_ref  : [D, 1]  f32  layer-l first Linear bias
        w2_ref  : [D, D]  bf16 layer-l second Linear weight
        b2_ref  : [D, 1]  f32  layer-l second Linear bias
        oT_ref  : [D, TN] f32  output column tile (transposed features)
        x_buf   : VMEM [2, D, Np] bf16 feature ping-pong carried across layers
        dma_sem : DMA semaphore for the one-time feature load
        """
        l = pl.program_id(0)
        t = pl.program_id(1)

        @pl.when((l == 0) & (t == 0))
        def _load_initial_features():
            cp = pltpu.make_async_copy(xT_hbm, x_buf.at[0], dma_sem)
            cp.start()
            cp.wait()

        parity = l % 2
        src = x_buf[parity]                                    # [D, Np] bf16
        col = pl.multiple_of(t * tn, LANE)
        if adj_resident:
            adj_tile = adjT_ref[:, pl.ds(col, tn)]             # [Np, TN] bf16
        else:
            adj_tile = adjT_ref[...]                           # [Np, TN] bf16

        # aggregation + (1+eps)*self in one bf16 MXU matmul, f32 accumulation
        h = jnp.dot(src, adj_tile, preferred_element_type=jnp.float32)   # [D, TN]

        # MLP: Linear -> Tanh -> Linear (feature-major: W @ h + b), bf16 MXU
        z1 = jnp.dot(w1_ref[...], h.astype(jnp.bfloat16),
                     preferred_element_type=jnp.float32) + b1_ref[...]
        h1 = jnp.tanh(z1)
        out = jnp.dot(w2_ref[...], h1.astype(jnp.bfloat16),
                      preferred_element_type=jnp.float32) + b2_ref[...]

        oT_ref[...] = out
        # stash as the next layer's aggregation input (bf16 carry)
        x_buf[1 - parity, :, pl.ds(col, tn)] = out.astype(jnp.bfloat16)

    return kernel


def gin_module_forward(adj, x, w1_all, b1_all, w2_all, b2_all):
    """GIN_Module.forward over a single homogeneous graph (dense adjacency).

    adj    : [N, N] f32, adj[dst, src] = 1 for edge src -> dst
    x      : [N, D] f32 node features
    w*_all : [L, D, D] torch-layout ([out, in]) Linear weights per layer
    b*_all : [L, D]    Linear biases per layer
    returns: [N, D] f32
    """
    # TODO(synk): the `blocks` branch of the PyTorch forward (per-layer bipartite
    # DGL block) would use a different rectangular adjacency per layer.
    N = x.shape[0]
    L = w1_all.shape[0]
    Np = max(_round_up(N, LANE), LANE)
    adj_resident, TN, est_bytes = _plan_tiles(Np)

    # Fold (1+eps)*x_i into the adjacency diagonal, transpose to adjT[src, dst],
    # pad to a lane-aligned node count, narrow to bf16 (0/1/(1+eps) exact).
    adj_self = adj + (1.0 + EPS) * jnp.eye(N, dtype=adj.dtype)
    adjT = jnp.zeros((Np, Np), jnp.bfloat16).at[:N, :N].set(
        adj_self.T.astype(jnp.bfloat16))
    xT = jnp.zeros((D, Np), jnp.bfloat16).at[:, :N].set(x.T.astype(jnp.bfloat16))

    w1c = w1_all.astype(jnp.bfloat16)
    w2c = w2_all.astype(jnp.bfloat16)
    b1c = b1_all.reshape(L, D, 1).astype(jnp.float32)
    b2c = b2_all.reshape(L, D, 1).astype(jnp.float32)

    if adj_resident:
        adj_spec = pl.BlockSpec((Np, Np), lambda l, t: (0, 0))   # fetched once
    else:
        adj_spec = pl.BlockSpec((Np, TN), lambda l, t: (0, t))   # streamed per step

    vmem_limit = int(min(max(est_bytes + (8 << 20), 32 << 20), 56 << 20))

    grid = (L, Np // TN)
    oT = pl.pallas_call(
        _make_gin_kernel(adj_resident, TN),
        out_shape=jax.ShapeDtypeStruct((D, Np), jnp.float32),
        grid_spec=pltpu.PrefetchScalarGridSpec(
            num_scalar_prefetch=0,
            grid=grid,
            in_specs=[
                adj_spec,                                            # adjT
                pl.BlockSpec(memory_space=pl.ANY),                   # xT stays in HBM
                pl.BlockSpec((None, D, D), lambda l, t: (l, 0, 0)),  # W1 of layer l
                pl.BlockSpec((None, D, 1), lambda l, t: (l, 0, 0)),  # b1 of layer l
                pl.BlockSpec((None, D, D), lambda l, t: (l, 0, 0)),  # W2 of layer l
                pl.BlockSpec((None, D, 1), lambda l, t: (l, 0, 0)),  # b2 of layer l
            ],
            out_specs=pl.BlockSpec((D, TN), lambda l, t: (0, t)),
            scratch_shapes=[
                pltpu.VMEM((2, D, Np), jnp.bfloat16),
                pltpu.SemaphoreType.DMA,
            ],
        ),
        compiler_params=pltpu.CompilerParams(
            # both axes carry sequential dependencies through the x_buf scratch
            dimension_semantics=("arbitrary", "arbitrary"),
            vmem_limit_bytes=vmem_limit,
        ),
    )(adjT, xT, w1c, b1c, w2c, b2c)

    return oT[:, :N].T


if __name__ == "__main__":
    num_gcn_layers = 2
    N = 250  # small synthetic graph; not a multiple of 128 to exercise padding

    key = jax.random.PRNGKey(0)
    k_adj, k_x, k_p = jax.random.split(key, 3)

    # deterministic random sparse-ish graph as a dense float adjacency
    adj = jax.random.bernoulli(k_adj, p=0.05, shape=(N, N)).astype(jnp.float32)
    x = jax.random.normal(k_x, (N, D), jnp.float32)

    # torch.nn.Linear default init U(-1/sqrt(in), 1/sqrt(in)), weights in [out, in]
    bound = 1.0 / jnp.sqrt(jnp.float32(D))
    pk = jax.random.split(k_p, 4)
    w1_all = jax.random.uniform(pk[0], (num_gcn_layers, D, D), jnp.float32, -bound, bound)
    b1_all = jax.random.uniform(pk[1], (num_gcn_layers, D), jnp.float32, -bound, bound)
    w2_all = jax.random.uniform(pk[2], (num_gcn_layers, D, D), jnp.float32, -bound, bound)
    b2_all = jax.random.uniform(pk[3], (num_gcn_layers, D), jnp.float32, -bound, bound)

    out = jax.jit(gin_module_forward)(adj, x, w1_all, b1_all, w2_all, b2_all)
    out = jax.block_until_ready(out)
    assert out.shape == (N, D)

    # Reference 1: matched precision (bf16 matmul operands, f32 accumulation),
    # tight tolerance -> validates the kernel plumbing/semantics.
    # Reference 2: pure f32 PyTorch semantics, loose tolerance for bf16 rounding.
    hp = jax.lax.Precision.HIGHEST

    def bf(a):
        return a.astype(jnp.bfloat16).astype(jnp.float32)

    adj_self = adj + (1.0 + EPS) * jnp.eye(N, dtype=adj.dtype)
    ref_bf = x
    ref_f32 = x
    for i in range(num_gcn_layers):
        # matched-precision reference (mirrors the kernel's bf16 operands)
        agg = jnp.dot(adj_self, bf(ref_bf), precision=hp)
        z1 = jnp.dot(bf(agg), bf(w1_all[i]).T, precision=hp) + b1_all[i]
        ref_bf = jnp.dot(bf(jnp.tanh(z1)), bf(w2_all[i]).T, precision=hp) + b2_all[i]
        # full-f32 reference of the PyTorch forward (GINConv sum aggregator, eps=0)
        aggf = (1.0 + EPS) * ref_f32 + jnp.dot(adj, ref_f32, precision=hp)
        ref_f32 = jnp.dot(jnp.tanh(jnp.dot(aggf, w1_all[i].T, precision=hp) + b1_all[i]),
                          w2_all[i].T, precision=hp) + b2_all[i]

    err_matched = float(jnp.max(jnp.abs(out - ref_bf)))
    err_f32 = float(jnp.max(jnp.abs(out - ref_f32)))
    assert err_matched < 5e-3, f"mismatch vs matched-precision reference: {err_matched}"
    assert err_f32 < 5e-2, f"mismatch vs f32 reference: {err_f32}"

    print("KERNEL_OK")
</pallas_src>

<mosaic_0001>
module attributes {stable_mosaic.version = 11 : i64} {
  func.func @kernel(%arg0: i32, %arg1: i32, %arg2: memref<256x256xbf16, #tpu.memory_space<vmem>>, %arg3: memref<64x256xbf16, #tpu.memory_space<any>>, %arg4: memref<1x64x64xbf16, #tpu.memory_space<vmem>>, %arg5: memref<1x64x1xf32, #tpu.memory_space<vmem>>, %arg6: memref<1x64x64xbf16, #tpu.memory_space<vmem>>, %arg7: memref<1x64x1xf32, #tpu.memory_space<vmem>>, %arg8: memref<64x256xf32, #tpu.memory_space<vmem>>, %arg9: memref<2x64x256xbf16, #tpu.memory_space<vmem>>, %arg10: memref<!tpu.dma_semaphore, #tpu.memory_space<semaphore_mem>>) attributes {dimension_semantics = [#tpu.dimension_semantics<arbitrary>, #tpu.dimension_semantics<arbitrary>], iteration_bounds = array<i64: 2, 1>, scalar_prefetch = 0 : i64, scratch_operands = 2 : i64, tpu.core_type = #tpu.core_type<tc>, window_params = [{pipeline_mode = #tpu.pipeline_mode<synchronous>, transform_indices = @transform_0, window_bounds = array<i64: 256, 256>}, {}, {transform_indices = @transform_2, window_bounds = array<i64: 1, 64, 64>}, {transform_indices = @transform_3, window_bounds = array<i64: 1, 64, 1>}, {transform_indices = @transform_4, window_bounds = array<i64: 1, 64, 64>}, {transform_indices = @transform_5, window_bounds = array<i64: 1, 64, 1>}, {transform_indices = @transform_6, window_bounds = array<i64: 64, 256>}]} {
    %c0_i32 = arith.constant 0 : i32
    %0 = arith.cmpi eq, %arg0, %c0_i32 : i32
    %c0_i32_0 = arith.constant 0 : i32
    %1 = arith.cmpi eq, %arg1, %c0_i32_0 : i32
    %2 = arith.andi %0, %1 : i1
    %3 = arith.extui %2 : i1 to i32
    %c0_i32_1 = arith.constant 0 : i32
    %4 = arith.cmpi ne, %3, %c0_i32_1 : i32
    scf.if %4 {
      %c0_i32_26 = arith.constant 0 : i32
      %c0_i32_27 = arith.constant 0 : i32
      %c0_i32_28 = arith.constant 0 : i32
      %48 = tpu.memref_slice %arg9[%c0_i32_26, %c0_i32_27, %c0_i32_28] : memref<2x64x256xbf16, #tpu.memory_space<vmem>> -> memref<1x64x256xbf16, #tpu.memory_space<vmem>>
      %49 = tpu.memref_squeeze %48 : memref<1x64x256xbf16, #tpu.memory_space<vmem>> -> memref<64x256xbf16, #tpu.memory_space<vmem>>
      tpu.enqueue_dma source(%arg3 : memref<64x256xbf16, #tpu.memory_space<any>>) target(%49 : memref<64x256xbf16, #tpu.memory_space<vmem>>) target_semaphore(%arg10 : memref<!tpu.dma_semaphore, #tpu.memory_space<semaphore_mem>>)
      %c0_i32_29 = arith.constant 0 : i32
      %c0_i32_30 = arith.constant 0 : i32
      %c0_i32_31 = arith.constant 0 : i32
      %50 = tpu.memref_slice %arg9[%c0_i32_29, %c0_i32_30, %c0_i32_31] : memref<2x64x256xbf16, #tpu.memory_space<vmem>> -> memref<1x64x256xbf16, #tpu.memory_space<vmem>>
      %51 = tpu.memref_squeeze %50 : memref<1x64x256xbf16, #tpu.memory_space<vmem>> -> memref<64x256xbf16, #tpu.memory_space<vmem>>
      tpu.wait_dma2 semaphore(%arg10 : memref<!tpu.dma_semaphore, #tpu.memory_space<semaphore_mem>>) src(%arg3 : memref<64x256xbf16, #tpu.memory_space<any>>) dst(%51 : memref<64x256xbf16, #tpu.memory_space<vmem>>)
    } else {
    }
    %c2_i32 = arith.constant 2 : i32
    %c0_i32_2 = arith.constant 0 : i32
    %5 = arith.cmpi eq, %c2_i32, %c0_i32_2 : i32
    %c1_i32 = arith.constant 1 : i32
    %6 = arith.select %5, %c1_i32, %c2_i32 : i32
    %7 = arith.remsi %arg0, %6 : i32
    %c0_i32_3 = arith.constant 0 : i32
    %8 = arith.cmpi ne, %7, %c0_i32_3 : i32
    %c0_i32_4 = arith.constant 0 : i32
    %9 = arith.cmpi slt, %7, %c0_i32_4 : i32
    %c0_i32_5 = arith.constant 0 : i32
    %10 = arith.cmpi slt, %6, %c0_i32_5 : i32
    %11 = arith.xori %9, %10 : i1
    %12 = arith.andi %11, %8 : i1
    %13 = arith.addi %7, %6 : i32
    %14 = arith.select %12, %13, %7 : i32
    %15 = arith.index_cast %14 : i32 to index
    %c0 = arith.constant 0 : index
    %c0_6 = arith.constant 0 : index
    %16 = vector.load %arg9[%15, %c0, %c0_6] : memref<2x64x256xbf16, #tpu.memory_space<vmem>>, vector<1x64x256xbf16>
    %17 = vector.shape_cast %16 : vector<1x64x256xbf16> to vector<64x256xbf16>
    %c256_i32 = arith.constant 256 : i32
    %18 = arith.muli %arg1, %c256_i32 : i32
    %19 = tpu.assume_multiple %18, 128 : i32
    %c0_7 = arith.constant 0 : index
    %20 = arith.index_cast %19 : i32 to index
    %21 = vector.load %arg2[%c0_7, %20] : memref<256x256xbf16, #tpu.memory_space<vmem>>, vector<256x256xbf16>
    %cst = arith.constant dense<0.000000e+00> : vector<64x256xf32>
    %22 = tpu.matmul %17, %21, %cst {dimension_numbers = #tpu.dot_dimension_numbers<[1], [0], [0], [1], [0, 0, 1, 1], [], []>} : vector<64x256xbf16>, vector<256x256xbf16>, vector<64x256xf32> -> vector<64x256xf32>
    %c0_8 = arith.constant 0 : index
    %c0_9 = arith.constant 0 : index
    %c0_10 = arith.constant 0 : index
    %23 = vector.load %arg4[%c0_8, %c0_9, %c0_10] : memref<1x64x64xbf16, #tpu.memory_space<vmem>>, vector<1x64x64xbf16>
    %24 = vector.shape_cast %23 : vector<1x64x64xbf16> to vector<64x64xbf16>
    %25 = arith.truncf %22 : vector<64x256xf32> to vector<64x256xbf16>
    %cst_11 = arith.constant dense<0.000000e+00> : vector<64x256xf32>
    %26 = tpu.matmul %24, %25, %cst_11 {dimension_numbers = #tpu.dot_dimension_numbers<[1], [0], [0], [1], [0, 0, 1, 1], [], []>} : vector<64x64xbf16>, vector<64x256xbf16>, vector<64x256xf32> -> vector<64x256xf32>
    %c0_12 = arith.constant 0 : index
    %c0_13 = arith.constant 0 : index
    %c0_14 = arith.constant 0 : index
    %27 = vector.load %arg5[%c0_12, %c0_13, %c0_14] : memref<1x64x1xf32, #tpu.memory_space<vmem>>, vector<1x64x1xf32>
    %28 = vector.shape_cast %27 : vector<1x64x1xf32> to vector<64x1xf32>
    %29 = vector.broadcast %28 : vector<64x1xf32> to vector<64x256xf32>
    %30 = arith.addf %26, %29 : vector<64x256xf32>
    %31 = math.tanh %30 : vector<64x256xf32>
    %c0_15 = arith.constant 0 : index
    %c0_16 = arith.constant 0 : index
    %c0_17 = arith.constant 0 : index
    %32 = vector.load %arg6[%c0_15, %c0_16, %c0_17] : memref<1x64x64xbf16, #tpu.memory_space<vmem>>, vector<1x64x64xbf16>
    %33 = vector.shape_cast %32 : vector<1x64x64xbf16> to vector<64x64xbf16>
    %34 = arith.truncf %31 : vector<64x256xf32> to vector<64x256xbf16>
    %cst_18 = arith.constant dense<0.000000e+00> : vector<64x256xf32>
    %35 = tpu.matmul %33, %34, %cst_18 {dimension_numbers = #tpu.dot_dimension_numbers<[1], [0], [0], [1], [0, 0, 1, 1], [], []>} : vector<64x64xbf16>, vector<64x256xbf16>, vector<64x256xf32> -> vector<64x256xf32>
    %c0_19 = arith.constant 0 : index
    %c0_20 = arith.constant 0 : index
    %c0_21 = arith.constant 0 : index
    %36 = vector.load %arg7[%c0_19, %c0_20, %c0_21] : memref<1x64x1xf32, #tpu.memory_space<vmem>>, vector<1x64x1xf32>
    %37 = vector.shape_cast %36 : vector<1x64x1xf32> to vector<64x1xf32>
    %38 = vector.broadcast %37 : vector<64x1xf32> to vector<64x256xf32>
    %39 = arith.addf %35, %38 : vector<64x256xf32>
    %c0_22 = arith.constant 0 : index
    %c0_23 = arith.constant 0 : index
    %40 = vector.load %arg8[%c0_22, %c0_23] : memref<64x256xf32, #tpu.memory_space<vmem>>, vector<64x256xf32>
    tpu.vector_store %arg8[%c0_22, %c0_23], %39 {strides = array<i32>} : memref<64x256xf32, #tpu.memory_space<vmem>>, vector<64x256xf32>,
    %41 = arith.truncf %39 : vector<64x256xf32> to vector<64x256xbf16>
    %c1_i32_24 = arith.constant 1 : i32
    %42 = arith.subi %c1_i32_24, %14 : i32
    %43 = arith.index_cast %42 : i32 to index
    %c0_25 = arith.constant 0 : index
    %44 = arith.index_cast %19 : i32 to index
    %45 = vector.load %arg9[%43, %c0_25, %44] : memref<2x64x256xbf16, #tpu.memory_space<vmem>>, vector<1x64x256xbf16>
    %46 = vector.shape_cast %45 : vector<1x64x256xbf16> to vector<64x256xbf16>
    %47 = vector.shape_cast %41 : vector<64x256xbf16> to vector<1x64x256xbf16>
    tpu.vector_store %arg9[%43, %c0_25, %44], %47 {strides = array<i32>} : memref<2x64x256xbf16, #tpu.memory_space<vmem>>, vector<1x64x256xbf16>,
    return
  }
  func.func @transform_0(%arg0: i32, %arg1: i32) -> (i32, i32) {
    %c0_i32 = arith.constant 0 : i32
    %c0_i32_0 = arith.constant 0 : i32
    %c0_i32_1 = arith.constant 0 : i32
    return %c0_i32, %c0_i32_0 : i32, i32
  }
  func.func @transform_2(%arg0: i32, %arg1: i32) -> (i32, i32, i32) {
    %c0_i32 = arith.constant 0 : i32
    %c0_i32_0 = arith.constant 0 : i32
    %c0_i32_1 = arith.constant 0 : i32
    return %arg0, %c0_i32, %c0_i32_0 : i32, i32, i32
  }
  func.func @transform_3(%arg0: i32, %arg1: i32) -> (i32, i32, i32) {
    %c0_i32 = arith.constant 0 : i32
    %c0_i32_0 = arith.constant 0 : i32
    %c0_i32_1 = arith.constant 0 : i32
    return %arg0, %c0_i32, %c0_i32_0 : i32, i32, i32
  }
  func.func @transform_4(%arg0: i32, %arg1: i32) -> (i32, i32, i32) {
    %c0_i32 = arith.constant 0 : i32
    %c0_i32_0 = arith.constant 0 : i32
    %c0_i32_1 = arith.constant 0 : i32
    return %arg0, %c0_i32, %c0_i32_0 : i32, i32, i32
  }
  func.func @transform_5(%arg0: i32, %arg1: i32) -> (i32, i32, i32) {
    %c0_i32 = arith.constant 0 : i32
    %c0_i32_0 = arith.constant 0 : i32
    %c0_i32_1 = arith.constant 0 : i32
    return %arg0, %c0_i32, %c0_i32_0 : i32, i32, i32
  }
  func.func @transform_6(%arg0: i32, %arg1: i32) -> (i32, i32) {
    %c0_i32 = arith.constant 0 : i32
    %c0_i32_0 = arith.constant 0 : i32
    return %c0_i32, %arg1 : i32, i32
  }
}

</mosaic_0001>

<llo_original>
// kernel: gin_module_forward.1
$region0: #{gin_module_forward.1}
  #allocation0 [shape = 'u32[]', space=smem, size = 0x4, offset = 0x4, fixed_abs, tag = 'smem constant byte address 0x4 - core index']
  #allocation1 [shape = 'u32[144,128]{1,0:T(1,128)}', space=vmem, size = 0x12000, scoped, tag = 'internal scratch']
  #allocation2 [shape = 'bf16[2,64,256]{2,1,0:T(8,128)(2,1)}', space=vmem, size = 0x10000, scoped, tag = 'scratch operand']
  #allocation3 [shape = 's32[1]{0}', space=sflag, size = 0x4, scoped, tag = 'scratch operand']
  #allocation4 [shape = 's32[]', space=sflag, size = 0x4, offset = 0, fixed_abs, tag = 'sflag constant byte address 0x0 - dummy sync flag']
  %s0 = inlined_call_operand.vmem [shape: bf16[256,256], index: 0, kind: input, shape index: {}]
  %s1 = inlined_call_operand.vmem [shape: bf16[64,256], index: 1, kind: input, shape index: {}]
  %s2 = inlined_call_operand.vmem [shape: bf16[2,64,64], index: 2, kind: input, shape index: {}]
  %s3 = inlined_call_operand.vmem [shape: f32[2,64,1], index: 3, kind: input, shape index: {}]
  %s4 = inlined_call_operand.vmem [shape: bf16[2,64,64], index: 4, kind: input, shape index: {}]
  %s5 = inlined_call_operand.vmem [shape: f32[2,64,1], index: 5, kind: input, shape index: {}]
  %s6 = inlined_call_operand.vmem [shape: f32[64,256], index: 6, kind: output, shape index: {}]
  %s7 = sld [smem:[#allocation0]]
  $region91: #{gin_module_forward.1} parent=0
    _
  %s9 = ssub.s32 1, %s7
  %s10 = scalar_select 0, %s9, %s7
  loop: start=0, step=1, limit=4
  $region2: #{gin_module_forward.1} parent=0 // loop_pre_header
    _
  $region3: #{gin_module_forward.1} parent=0 // loop_header
    %s12 = sphi 0, %s16
    %p13 = scmp.ge.s32.totalorder %s12, 4
    %s19 = sphi 0, %s31
    %s20 = sphi 0, %s27
    %s21 = sphi 0, %s19
    %s22 = sphi 0, %s20
    %s23 = sphi 0, %s21
    %s24 = sphi 0, %s22
    %s32 = sphi 0, %s32
    %s34 = sphi 0, %s32
    %s35 = sphi 0, %s34
    %s49 = sphi 0, %s35
    %s55 = sphi 0, %s57
    %s58 = sphi 0, %s55
    %s59 = sphi 0, %s58
    %s75 = sphi 0, %s59
    %s81 = sphi 0, %s83
    %s84 = sphi 0, %s81
    %s85 = sphi 0, %s84
    %s101 = sphi 0, %s85
    %s107 = sphi 0, %s109
    %s110 = sphi 0, %s107
    %s111 = sphi 0, %s110
    %s127 = sphi 0, %s111
    %s133 = sphi 0, %s135
    %s136 = sphi 0, %s133
    %s137 = sphi 0, %s136
    %s153 = sphi 0, %s137
    %s159 = sphi 0, %s161
    %s162 = sphi 0, %s159
    %s163 = sphi 0, %s162
    %s179 = sphi 0, %s163
  $region4: #{gin_module_forward.1} parent=0 // loop_header_branch
    %15 = sbr.rel (%p13) target = $region8
  $region5: #{gin_module_forward.1} parent=0 // loop_body
    %s17 = ssub.s32 %s12, 1
    %s18 = ssub.s32 %s12, 2
    %s25 = sadd.s32 1, %s20
    %p26 = scmp.ge.s32.totalorder %s25, 1
    %s27 = scalar_select %p26, 0, %s25
    %s28 = sadd.s32 1, %s19
    %s29 = scalar_select %p26, %s28, %s19
    %p30 = scmp.ge.s32.totalorder %s29, 2
    %s31 = scalar_select %p30, 0, %s29
    %s33 = sadd.s32 %s32, 1
    %p36 = scmp.eq.s32.totalorder %s12, 1
    %p37 = scmp.ne.s32.totalorder %s32, %s34
    %p38 = scmp.eq.s32.totalorder %s12, 0
    %p39 = por %p37, %p38
    %p40 = scmp.ne.s32.totalorder %s32, %s34
    %p41 = scmp.eq.s32.totalorder %s17, 1
    %p42 = por %p40, %p41
    %p43 = scmp.ne.s32.totalorder %s34, %s35
    %p44 = scmp.eq.s32.totalorder %s17, 0
    %p45 = por %p43, %p44
    %p46 = scmp.ne.s32.totalorder %s34, %s35
    %p47 = scmp.eq.s32.totalorder %s18, 1
    %p48 = por %p46, %p47
    %p50 = scmp.ne.s32.totalorder %s35, %s49
    %p51 = scmp.eq.s32.totalorder %s18, 0
    %p52 = por %p50, %p51
    %s53 = ssub.s32 %s19, %s31
    %p54 = scmp.eq.s32.totalorder %s53, 0
    %s56 = sadd.s32 %s55, 1
    %s57 = scalar_select %p54, %s55, %s56
    %p60 = pneg %p54
    %p61 = scmp.eq.s32.totalorder %s12, 1
    %p62 = por %p60, %p61
    %p63 = scmp.ne.s32.totalorder %s55, %s58
    %p64 = scmp.eq.s32.totalorder %s12, 0
    %p65 = por %p63, %p64
    %p66 = scmp.ne.s32.totalorder %s55, %s58
    %p67 = scmp.eq.s32.totalorder %s17, 1
    %p68 = por %p66, %p67
    %p69 = scmp.ne.s32.totalorder %s58, %s59
    %p70 = scmp.eq.s32.totalorder %s17, 0
    %p71 = por %p69, %p70
    %p72 = scmp.ne.s32.totalorder %s58, %s59
    %p73 = scmp.eq.s32.totalorder %s18, 1
    %p74 = por %p72, %p73
    %p76 = scmp.ne.s32.totalorder %s59, %s75
    %p77 = scmp.eq.s32.totalorder %s18, 0
    %p78 = por %p76, %p77
    %s79 = ssub.s32 %s19, %s31
    %p80 = scmp.eq.s32.totalorder %s79, 0
    %s82 = sadd.s32 %s81, 1
    %s83 = scalar_select %p80, %s81, %s82
    %p86 = pneg %p80
    %p87 = scmp.eq.s32.totalorder %s12, 1
    %p88 = por %p86, %p87
    %p89 = scmp.ne.s32.totalorder %s81, %s84
    %p90 = scmp.eq.s32.totalorder %s12, 0
    %p91 = por %p89, %p90
    %p92 = scmp.ne.s32.totalorder %s81, %s84
    %p93 = scmp.eq.s32.totalorder %s17, 1
    %p94 = por %p92, %p93
    %p95 = scmp.ne.s32.totalorder %s84, %s85
    %p96 = scmp.eq.s32.totalorder %s17, 0
    %p97 = por %p95, %p96
    %p98 = scmp.ne.s32.totalorder %s84, %s85
    %p99 = scmp.eq.s32.totalorder %s18, 1
    %p100 = por %p98, %p99
    %p102 = scmp.ne.s32.totalorder %s85, %s101
    %p103 = scmp.eq.s32.totalorder %s18, 0
    %p104 = por %p102, %p103
    %s105 = ssub.s32 %s19, %s31
    %p106 = scmp.eq.s32.totalorder %s105, 0
    %s108 = sadd.s32 %s107, 1
    %s109 = scalar_select %p106, %s107, %s108
    %p112 = pneg %p106
    %p113 = scmp.eq.s32.totalorder %s12, 1
    %p114 = por %p112, %p113
    %p115 = scmp.ne.s32.totalorder %s107, %s110
    %p116 = scmp.eq.s32.totalorder %s12, 0
    %p117 = por %p115, %p116
    %p118 = scmp.ne.s32.totalorder %s107, %s110
    %p119 = scmp.eq.s32.totalorder %s17, 1
    %p120 = por %p118, %p119
    %p121 = scmp.ne.s32.totalorder %s110, %s111
    %p122 = scmp.eq.s32.totalorder %s17, 0
    %p123 = por %p121, %p122
    %p124 = scmp.ne.s32.totalorder %s110, %s111
    %p125 = scmp.eq.s32.totalorder %s18, 1
    %p126 = por %p124, %p125
    %p128 = scmp.ne.s32.totalorder %s111, %s127
    %p129 = scmp.eq.s32.totalorder %s18, 0
    %p130 = por %p128, %p129
    %s131 = ssub.s32 %s19, %s31
    %p132 = scmp.eq.s32.totalorder %s131, 0
    %s134 = sadd.s32 %s133, 1
    %s135 = scalar_select %p132, %s133, %s134
    %p138 = pneg %p132
    %p139 = scmp.eq.s32.totalorder %s12, 1
    %p140 = por %p138, %p139
    %p141 = scmp.ne.s32.totalorder %s133, %s136
    %p142 = scmp.eq.s32.totalorder %s12, 0
    %p143 = por %p141, %p142
    %p144 = scmp.ne.s32.totalorder %s133, %s136
    %p145 = scmp.eq.s32.totalorder %s17, 1
    %p146 = por %p144, %p145
    %p147 = scmp.ne.s32.totalorder %s136, %s137
    %p148 = scmp.eq.s32.totalorder %s17, 0
    %p149 = por %p147, %p148
    %p150 = scmp.ne.s32.totalorder %s136, %s137
    %p151 = scmp.eq.s32.totalorder %s18, 1
    %p152 = por %p150, %p151
    %p154 = scmp.ne.s32.totalorder %s137, %s153
    %p155 = scmp.eq.s32.totalorder %s18, 0
    %p156 = por %p154, %p155
    %s157 = ssub.s32 %s20, %s27
    %p158 = scmp.eq.s32.totalorder %s157, 0
    %s160 = sadd.s32 %s159, 1
    %s161 = scalar_select %p158, %s159, %s160
    %p164 = pneg %p158
    %p165 = scmp.eq.s32.totalorder %s12, 1
    %p166 = por %p164, %p165
    %p167 = scmp.ne.s32.totalorder %s159, %s162
    %p168 = scmp.eq.s32.totalorder %s12, 0
    %p169 = por %p167, %p168
    %p170 = scmp.ne.s32.totalorder %s159, %s162
    %p171 = scmp.eq.s32.totalorder %s17, 1
    %p172 = por %p170, %p171
    %p173 = scmp.ne.s32.totalorder %s162, %s163
    %p174 = scmp.eq.s32.totalorder %s17, 0
    %p175 = por %p173, %p174
    %p176 = scmp.ne.s32.totalorder %s162, %s163
    %p177 = scmp.eq.s32.totalorder %s18, 1
    %p178 = por %p176, %p177
    %p180 = scmp.ne.s32.totalorder %s163, %s179
    %p181 = scmp.eq.s32.totalorder %s18, 0
    %p182 = por %p180, %p181
    %p183 = scmp.le.s32.totalorder 1, %s12
    %p184 = scmp.lt.s32.totalorder %s12, 3
    %p185 = pnand %p183, %p184
    %p186 = pneg %p185
    // Predicated region
    $region9: #{gin_module_forward.1} parent=5 // pred_check
      _
    $region10: #{gin_module_forward.1} parent=5 // pred_check_branch
      %188 = sbr.rel (%p185) target = $region12
    $region11: #{gin_module_forward.1} parent=5 // pred_region
      %s189 = ssub.s32 %s12, 1
      // Predicated region
      $region13: #{gin_module_forward.1} parent=11 // pred_check
        %p190 = pneg %p45
      $region14: #{gin_module_forward.1} parent=11 // pred_check_branch
        %192 = sbr.rel (%p190) target = $region16
      $region15: #{gin_module_forward.1} parent=11 // pred_region
        _
      $region16: #{gin_module_forward.1} parent=11 // pred_fallthru
        _
    $region12: #{gin_module_forward.1} parent=5 // pred_fallthru
      _
    %p193 = scmp.lt.s32.totalorder %s12, 2
    // Predicated region
    $region17: #{gin_module_forward.1} parent=5 // pred_check
      %p194 = pneg %p193
    $region18: #{gin_module_forward.1} parent=5 // pred_check_branch
      %196 = sbr.rel (%p194) target = $region20
    $region19: #{gin_module_forward.1} parent=5 // pred_region
      // Predicated region
      $region21: #{gin_module_forward.1} parent=19 // pred_check
        %p197 = pneg %p65
      $region22: #{gin_module_forward.1} parent=19 // pred_check_branch
        %199 = sbr.rel (%p197) target = $region24
      $region23: #{gin_module_forward.1} parent=19 // pred_region
        %p200 = scmp.lt.s32.totalorder %s19, 1
        %s201 = scalar_select %p200, %s19, 1
        %s202 = smul.addr %s201, 8
        %s203 = smul.addr %s202, 4
        %s204 = scalar_lea.vmem %s2, %s203
      $region24: #{gin_module_forward.1} parent=19 // pred_fallthru
        _
      // Predicated region
      $region25: #{gin_module_forward.1} parent=19 // pred_check
        %p205 = pneg %p91
      $region26: #{gin_module_forward.1} parent=19 // pred_check_branch
        %207 = sbr.rel (%p205) target = $region28
      $region27: #{gin_module_forward.1} parent=19 // pred_region
        %p208 = scmp.lt.s32.totalorder %s19, 1
        %s209 = scalar_select %p208, %s19, 1
        %s210 = smul.addr %s209, 8
        %s211 = smul.addr %s210, 8
        %s212 = scalar_lea.vmem %s3, %s211
      $region28: #{gin_module_forward.1} parent=19 // pred_fallthru
        _
      // Predicated region
      $region29: #{gin_module_forward.1} parent=19 // pred_check
        %p213 = pneg %p117
      $region30: #{gin_module_forward.1} parent=19 // pred_check_branch
        %215 = sbr.rel (%p213) target = $region32
      $region31: #{gin_module_forward.1} parent=19 // pred_region
        %p216 = scmp.lt.s32.totalorder %s19, 1
        %s217 = scalar_select %p216, %s19, 1
        %s218 = smul.addr %s217, 8
        %s219 = smul.addr %s218, 4
        %s220 = scalar_lea.vmem %s4, %s219
      $region32: #{gin_module_forward.1} parent=19 // pred_fallthru
        _
      // Predicated region
      $region33: #{gin_module_forward.1} parent=19 // pred_check
        %p221 = pneg %p143
      $region34: #{gin_module_forward.1} parent=19 // pred_check_branch
        %223 = sbr.rel (%p221) target = $region36
      $region35: #{gin_module_forward.1} parent=19 // pred_region
        %p224 = scmp.lt.s32.totalorder %s19, 1
        %s225 = scalar_select %p224, %s19, 1
        %s226 = smul.addr %s225, 8
        %s227 = smul.addr %s226, 8
        %s228 = scalar_lea.vmem %s5, %s227
      $region36: #{gin_module_forward.1} parent=19 // pred_fallthru
        _
    $region20: #{gin_module_forward.1} parent=5 // pred_fallthru
      _
    %p229 = scmp.le.s32.totalorder 1, %s12
    %p230 = scmp.lt.s32.totalorder %s12, 3
    %p231 = pnand %p229, %p230
    %p232 = pneg %p231
    // Predicated region
    $region37: #{gin_module_forward.1} parent=5 // pred_check
      _
    $region38: #{gin_module_forward.1} parent=5 // pred_check_branch
      %234 = sbr.rel (%p231) target = $region40
    $region39: #{gin_module_forward.1} parent=5 // pred_region
      %s235 = ssub.s32 %s12, 1
      %p236 = pneg %p45
      %p237 = pneg %p42
      %p238 = scmp.lt.s32.totalorder %s21, 1
      %s239 = scalar_select %p238, %s21, 1
      %s240 = smul.addr %s239, 8
      %s241 = smul.addr %s240, 4
      %s242 = scalar_lea.vmem %s2, %s241
      %p243 = pneg %p71
      %p244 = pneg %p68
      %p245 = scmp.lt.s32.totalorder %s21, 1
      %s246 = scalar_select %p245, %s21, 1
      %s247 = smul.addr %s246, 8
      %s248 = smul.addr %s247, 8
      %s249 = scalar_lea.vmem %s3, %s248
      %p250 = pneg %p97
      %p251 = pneg %p94
      %p252 = scmp.lt.s32.totalorder %s21, 1
      %s253 = scalar_select %p252, %s21, 1
      %s254 = smul.addr %s253, 8
      %s255 = smul.addr %s254, 4
      %s256 = scalar_lea.vmem %s4, %s255
      %p257 = pneg %p123
      %p258 = pneg %p120
      %p259 = scmp.lt.s32.totalorder %s21, 1
      %s260 = scalar_select %p259, %s21, 1
      %s261 = smul.addr %s260, 8
      %s262 = smul.addr %s261, 8
      %s263 = scalar_lea.vmem %s5, %s262
      %p264 = pneg %p149
      %p265 = pneg %p146
      %p266 = pneg %p175
      %p267 = pneg %p172
      %s268 = smul.u32 2, %s22
      %p269 = scmp.lt.s32.totalorder %s268, 1
      %s270 = scalar_select %p269, %s268, 1
      %s271 = smul.addr %s270, 8
      %s272 = scalar_lea.vmem %s6, %s271
      %p273 = scmp.lt.s32.totalorder %s21, 1
      %s274 = scalar_select %p273, %s21, 1
      %s275 = smul.addr %s274, 8
      %s276 = smul.addr %s275, 4
      %s277 = scalar_lea.vmem %s2, %s276
      %p278 = scmp.lt.s32.totalorder %s21, 1
      %s279 = scalar_select %p278, %s21, 1
      %s280 = smul.addr %s279, 8
      %s281 = smul.addr %s280, 8
      %s282 = scalar_lea.vmem %s3, %s281
      %p283 = scmp.lt.s32.totalorder %s21, 1
      %s284 = scalar_select %p283, %s21, 1
      %s285 = smul.addr %s284, 8
      %s286 = smul.addr %s285, 4
      %s287 = scalar_lea.vmem %s4, %s286
      %p288 = scmp.lt.s32.totalorder %s21, 1
      %s289 = scalar_select %p288, %s21, 1
      %s290 = smul.addr %s289, 8
      %s291 = smul.addr %s290, 8
      %s292 = scalar_lea.vmem %s5, %s291
      %s293 = smul.u32 2, %s22
      %p294 = scmp.lt.s32.totalorder %s293, 1
      %s295 = scalar_select %p294, %s293, 1
      %s296 = smul.addr %s295, 8
      %s297 = scalar_lea.vmem %s6, %s296
      %s298 = smul.u32 2, %s22
      %p300 = scmp.eq.s32.totalorder %s21, 0
      %p301 = scmp.eq.s32.totalorder %s22, 0
      %p302 = pnand %p300, %p301
      %p303 = pneg %p302
      // Predicated region
      $region41: #{gin_module_forward.1} parent=39 // pred_check
        _
      $region42: #{gin_module_forward.1} parent=39 // pred_check_branch
        %305 = sbr.rel (%p302) target = $region44
      $region43: #{gin_module_forward.1} parent=39 // pred_region
        %p307 = scmp.lt.u32.totalorder 64, 8
        %p308 = pneg %p307
        // Predicated region
        $region45: #{gin_module_forward.1} parent=43 // pred_check
          _
        $region46: #{gin_module_forward.1} parent=43 // pred_check_branch
          %310 = sbr.rel (%p307) target = $region48
        $region47: #{gin_module_forward.1} parent=43 // pred_region
          %s326 = sand.u32 64, 7
          %p327 = scmp.eq.s32.totalorder %s326, 0
          // Predicated region
          $region60: #{gin_module_forward.1} parent=47 // pred_check
            %p328 = pneg %p327
          $region61: #{gin_module_forward.1} parent=47 // pred_check_branch
            %330 = sbr.rel (%p328) target = $region63
          $region62: #{gin_module_forward.1} parent=47 // pred_region
            loop: start=0, step=1, limit=1
            $region64: #{gin_module_forward.1} parent=62 // loop_pre_header
              _
            $region65: #{gin_module_forward.1} parent=62 // loop_header
              %s332 = sphi 0, %s336
              %p333 = scmp.ge.s32.totalorder %s332, 1
              %s337 = sphi %s1, %s1
              %s338 = sphi [#allocation2], [#allocation2]
            $region66: #{gin_module_forward.1} parent=62 // loop_header_branch
              %335 = sbr.rel (%p333) target = $region70
            $region67: #{gin_module_forward.1} parent=62 // loop_body
              %v339 = vld [vmem:[%s337] sm:$0xff]
              %340 = vst [vmem:[%s338] sm:$0xff] %v339
              %v341 = vld [vmem:[%s337 + $0x8] sm:$0xff]
              %342 = vst [vmem:[%s338 + $0x8] sm:$0xff] %v341
              %v343 = vld [vmem:[%s337 + $0x10] sm:$0xff]
              %344 = vst [vmem:[%s338 + $0x10] sm:$0xff] %v343
              %v345 = vld [vmem:[%s337 + $0x18] sm:$0xff]
              %346 = vst [vmem:[%s338 + $0x18] sm:$0xff] %v345
              %v347 = vld [vmem:[%s337 + $0x20] sm:$0xff]
              %348 = vst [vmem:[%s338 + $0x20] sm:$0xff] %v347
              %v349 = vld [vmem:[%s337 + $0x28] sm:$0xff]
              %350 = vst [vmem:[%s338 + $0x28] sm:$0xff] %v349
              %v351 = vld [vmem:[%s337 + $0x30] sm:$0xff]
              %352 = vst [vmem:[%s338 + $0x30] sm:$0xff] %v351
              %v353 = vld [vmem:[%s337 + $0x38] sm:$0xff]
              %354 = vst [vmem:[%s338 + $0x38] sm:$0xff] %v353
            $region68: #{gin_module_forward.1} parent=62 // loop_footer
              %s336 = sadd.s32 1, %s332
            $region69: #{gin_module_forward.1} parent=62 // loop_footer_branch
              %331 = sbr.rel target = $region65
            $region70: #{gin_module_forward.1} parent=62 // loop_exit
              _
          $region63: #{gin_module_forward.1} parent=47 // pred_fallthru
            _
          %p355 = pneg %p327
          // Predicated region
          $region71: #{gin_module_forward.1} parent=47 // pred_check
            _
          $region72: #{gin_module_forward.1} parent=47 // pred_check_branch
            %357 = sbr.rel (%p327) target = $region74
          $region73: #{gin_module_forward.1} parent=47 // pred_region
            %s358 = sand.u32 64, 7
          $region74: #{gin_module_forward.1} parent=47 // pred_fallthru
            _
        $region48: #{gin_module_forward.1} parent=43 // pred_fallthru
          _
        // Predicated region
        $region49: #{gin_module_forward.1} parent=43 // pred_check
          %p311 = pneg %p307
        $region50: #{gin_module_forward.1} parent=43 // pred_check_branch
          %313 = sbr.rel (%p311) target = $region52
        $region51: #{gin_module_forward.1} parent=43 // pred_region
          %s314 = sshll.u32 1, 64
          %s315 = ssub.s32 %s314, 1
          loop: start=0, step=1, limit=1
          $region53: #{gin_module_forward.1} parent=51 // loop_pre_header
            _
          $region54: #{gin_module_forward.1} parent=51 // loop_header
            %s317 = sphi 0, %s321
            %p318 = scmp.ge.s32.totalorder %s317, 1
            %s322 = sphi %s1, %s1
            %s323 = sphi [#allocation2], [#allocation2]
          $region55: #{gin_module_forward.1} parent=51 // loop_header_branch
            %320 = sbr.rel (%p318) target = $region59
          $region56: #{gin_module_forward.1} parent=51 // loop_body
            %v324 = vld [vmem:[%s322] sm:%s315]
            %325 = vst [vmem:[%s323] sm:%s315] %v324
          $region57: #{gin_module_forward.1} parent=51 // loop_footer
            %s321 = sadd.s32 1, %s317
          $region58: #{gin_module_forward.1} parent=51 // loop_footer_branch
            %316 = sbr.rel target = $region54
          $region59: #{gin_module_forward.1} parent=51 // loop_exit
            _
        $region52: #{gin_module_forward.1} parent=43 // pred_fallthru
          _
        // Predicated region
        $region75: #{gin_module_forward.1} parent=43 // pred_check
          _
        $region76: #{gin_module_forward.1} parent=43 // pred_check_branch
          %361 = sbr.rel (0) target = $region78
        $region77: #{gin_module_forward.1} parent=43 // pred_region
          %362 = vsyncadd [#allocation3], 1024
        $region78: #{gin_module_forward.1} parent=43 // pred_fallthru
          _
        %s363 = smul.u32 4, 8
        %s364 = smul.u32 %s363, 2
        %s365 = sshll.u32 %s364, 4
        %366 = dma.done [#allocation3], %s365
      $region44: #{gin_module_forward.1} parent=39 // pred_fallthru
        _
      %p367 = scmp.lt.s32.totalorder %s21, 0
      %s368 = ssub.s32 0, %s21
      %s369 = scalar_select %p367, %s368, %s21
      %s370 = sand.u32 %s369, 1
      %s371 = ssub.s32 0, %s370
      %s372 = scalar_select %p367, %s371, %s370
      %p373 = scmp.ne.s32.totalorder %s372, 0
      %p374 = scmp.lt.s32.totalorder %s372, 0
      %p375 = pnand %p374, %p373
      %p376 = pneg %p375
      %s377 = sadd.s32 %s372, 2
      %s378 = scalar_select %p376, %s377, %s372
      %s379 = smul.u32 %s378, 16
      %s380 = smul.addr %s379, 4
      %s381 = scalar_lea.vmem [#allocation2], %s380
      %v382 = vld [vmem:[%s381] sm:$0xff]
      %v383 = vld [vmem:[%s381 + $0x8] sm:$0xff]
      %v384 = vld [vmem:[%s381 + $0x10] sm:$0xff]
      %v385 = vld [vmem:[%s381 + $0x18] sm:$0xff]
      %v386 = vld [vmem:[%s381 + $0x20] sm:$0xff]
      %v387 = vld [vmem:[%s381 + $0x28] sm:$0xff]
      %v388 = vld [vmem:[%s381 + $0x30] sm:$0xff]
      %v389 = vld [vmem:[%s381 + $0x38] sm:$0xff]
      %s390 = smul.u32 %s22, 256
      %s391 = sshra.s32 %s390, 7
      %s392 = sand.u32 %s390, 127
      %s393 = smul.addr %s391, 4
      %s394 = scalar_lea.vmem %s0, %s393
      %v395 = vld [vmem:[%s394] sm:$0xff]
      %v396 = vld [vmem:[%s394 + $0x8] sm:$0xff]
      %v397 = vld [vmem:[%s394 + $0x10] sm:$0xff]
      %v398 = vld [vmem:[%s394 + $0x18] sm:$0xff]
      %v399 = vld [vmem:[%s394 + $0x20] sm:$0xff]
      %v400 = vld [vmem:[%s394 + $0x28] sm:$0xff]
      %v401 = vld [vmem:[%s394 + $0x30] sm:$0xff]
      %v402 = vld [vmem:[%s394 + $0x38] sm:$0xff]
      %v403 = vld [vmem:[%s394 + $0x40] sm:$0xff]
      %v404 = vld [vmem:[%s394 + $0x48] sm:$0xff]
      %v405 = vld [vmem:[%s394 + $0x50] sm:$0xff]
      %v406 = vld [vmem:[%s394 + $0x58] sm:$0xff]
      %v407 = vld [vmem:[%s394 + $0x60] sm:$0xff]
      %v408 = vld [vmem:[%s394 + $0x68] sm:$0xff]
      %v409 = vld [vmem:[%s394 + $0x70] sm:$0xff]
      %v410 = vld [vmem:[%s394 + $0x78] sm:$0xff]
      %v411 = vld [vmem:[%s394 + $0x80] sm:$0xff]
      %v412 = vld [vmem:[%s394 + $0x88] sm:$0xff]
      %v413 = vld [vmem:[%s394 + $0x90] sm:$0xff]
      %v414 = vld [vmem:[%s394 + $0x98] sm:$0xff]
      %v415 = vld [vmem:[%s394 + $0xa0] sm:$0xff]
      %v416 = vld [vmem:[%s394 + $0xa8] sm:$0xff]
      %v417 = vld [vmem:[%s394 + $0xb0] sm:$0xff]
      %v418 = vld [vmem:[%s394 + $0xb8] sm:$0xff]
      %v419 = vld [vmem:[%s394 + $0xc0] sm:$0xff]
      %v420 = vld [vmem:[%s394 + $0xc8] sm:$0xff]
      %v421 = vld [vmem:[%s394 + $0xd0] sm:$0xff]
      %v422 = vld [vmem:[%s394 + $0xd8] sm:$0xff]
      %v423 = vld [vmem:[%s394 + $0xe0] sm:$0xff]
      %v424 = vld [vmem:[%s394 + $0xe8] sm:$0xff]
      %v425 = vld [vmem:[%s394 + $0xf0] sm:$0xff]
      %v426 = vld [vmem:[%s394 + $0xf8] sm:$0xff]
      %v435 = vunpack.c.l.b16 %v382
      %v436 = vunpack.c.h.b16 %v382
      %v437 = vunpack.c.l.b16 %v383
      %v438 = vunpack.c.h.b16 %v383
      %v439 = vunpack.c.l.b16 %v384
      %v440 = vunpack.c.h.b16 %v384
      %v441 = vunpack.c.l.b16 %v385
      %v442 = vunpack.c.h.b16 %v385
      %v443 = vunpack.c.l.b16 %v386
      %v444 = vunpack.c.h.b16 %v386
      %v445 = vunpack.c.l.b16 %v387
      %v446 = vunpack.c.h.b16 %v387
      %v447 = vunpack.c.l.b16 %v388
      %v448 = vunpack.c.h.b16 %v388
      %v449 = vunpack.c.l.b16 %v389
      %v450 = vunpack.c.h.b16 %v389
      %v451 = vpack.c.b16 %v437, %v435
      %v452 = vpack.c.b16 %v438, %v436
      %v453 = vpack.c.b16 %v441, %v439
      %v454 = vpack.c.b16 %v442, %v440
      %v455 = vpack.c.b16 %v445, %v443
      %v456 = vpack.c.b16 %v446, %v444
      %v457 = vpack.c.b16 %v449, %v447
      %v458 = vpack.c.b16 %v450, %v448
      %v499 = vunpack.c.l.b16 %v395
      %v500 = vunpack.c.h.b16 %v395
      %v501 = vunpack.c.l.b16 %v396
      %v502 = vunpack.c.h.b16 %v396
      %v503 = vunpack.c.l.b16 %v397
      %v504 = vunpack.c.h.b16 %v397
      %v505 = vunpack.c.l.b16 %v398
      %v506 = vunpack.c.h.b16 %v398
      %v507 = vunpack.c.l.b16 %v399
      %v508 = vunpack.c.h.b16 %v399
      %v509 = vunpack.c.l.b16 %v400
      %v510 = vunpack.c.h.b16 %v400
      %v511 = vunpack.c.l.b16 %v401
      %v512 = vunpack.c.h.b16 %v401
      %v513 = vunpack.c.l.b16 %v402
      %v514 = vunpack.c.h.b16 %v402
      %v515 = vunpack.c.l.b16 %v403
      %v516 = vunpack.c.h.b16 %v403
      %v517 = vunpack.c.l.b16 %v404
      %v518 = vunpack.c.h.b16 %v404
      %v519 = vunpack.c.l.b16 %v405
      %v520 = vunpack.c.h.b16 %v405
      %v521 = vunpack.c.l.b16 %v406
      %v522 = vunpack.c.h.b16 %v406
      %v523 = vunpack.c.l.b16 %v407
      %v524 = vunpack.c.h.b16 %v407
      %v525 = vunpack.c.l.b16 %v408
      %v526 = vunpack.c.h.b16 %v408
      %v527 = vunpack.c.l.b16 %v409
      %v528 = vunpack.c.h.b16 %v409
      %v529 = vunpack.c.l.b16 %v410
      %v530 = vunpack.c.h.b16 %v410
      %v531 = vunpack.c.l.b16 %v411
      %v532 = vunpack.c.h.b16 %v411
      %v533 = vunpack.c.l.b16 %v412
      %v534 = vunpack.c.h.b16 %v412
      %v535 = vunpack.c.l.b16 %v413
      %v536 = vunpack.c.h.b16 %v413
      %v537 = vunpack.c.l.b16 %v414
      %v538 = vunpack.c.h.b16 %v414
      %v539 = vunpack.c.l.b16 %v415
      %v540 = vunpack.c.h.b16 %v415
      %v541 = vunpack.c.l.b16 %v416
      %v542 = vunpack.c.h.b16 %v416
      %v543 = vunpack.c.l.b16 %v417
      %v544 = vunpack.c.h.b16 %v417
      %v545 = vunpack.c.l.b16 %v418
      %v546 = vunpack.c.h.b16 %v418
      %v547 = vunpack.c.l.b16 %v419
      %v548 = vunpack.c.h.b16 %v419
      %v549 = vunpack.c.l.b16 %v420
      %v550 = vunpack.c.h.b16 %v420
      %v551 = vunpack.c.l.b16 %v421
      %v552 = vunpack.c.h.b16 %v421
      %v553 = vunpack.c.l.b16 %v422
      %v554 = vunpack.c.h.b16 %v422
      %v555 = vunpack.c.l.b16 %v423
      %v556 = vunpack.c.h.b16 %v423
      %v557 = vunpack.c.l.b16 %v424
      %v558 = vunpack.c.h.b16 %v424
      %v559 = vunpack.c.l.b16 %v425
      %v560 = vunpack.c.h.b16 %v425
      %v561 = vunpack.c.l.b16 %v426
      %v562 = vunpack.c.h.b16 %v426
      %v563 = vpack.c.b16 %v501, %v499
      %v564 = vpack.c.b16 %v502, %v500
      %v565 = vpack.c.b16 %v505, %v503
      %v566 = vpack.c.b16 %v506, %v504
      %v567 = vpack.c.b16 %v509, %v507
      %v568 = vpack.c.b16 %v510, %v508
      %v569 = vpack.c.b16 %v513, %v511
      %v570 = vpack.c.b16 %v514, %v512
      %v571 = vpack.c.b16 %v517, %v515
      %v572 = vpack.c.b16 %v518, %v516
      %v573 = vpack.c.b16 %v521, %v519
      %v574 = vpack.c.b16 %v522, %v520
      %v575 = vpack.c.b16 %v525, %v523
      %v576 = vpack.c.b16 %v526, %v524
      %v577 = vpack.c.b16 %v529, %v527
      %v578 = vpack.c.b16 %v530, %v528
      %v579 = vpack.c.b16 %v533, %v531
      %v580 = vpack.c.b16 %v534, %v532
      %v581 = vpack.c.b16 %v537, %v535
      %v582 = vpack.c.b16 %v538, %v536
      %v583 = vpack.c.b16 %v541, %v539
      %v584 = vpack.c.b16 %v542, %v540
      %v585 = vpack.c.b16 %v545, %v543
      %v586 = vpack.c.b16 %v546, %v544
      %v587 = vpack.c.b16 %v549, %v547
      %v588 = vpack.c.b16 %v550, %v548
      %v589 = vpack.c.b16 %v553, %v551
      %v590 = vpack.c.b16 %v554, %v552
      %v591 = vpack.c.b16 %v557, %v555
      %v592 = vpack.c.b16 %v558, %v556
      %v593 = vpack.c.b16 %v561, %v559
      %v594 = vpack.c.b16 %v562, %v560
      %627 = vmatprep.subr.bf16.mxu0 %v578
      %628 = vmatpush1.bf16.msra.mxu0 %v577
      %629 = vmatprep.subr.bf16.mxu0 %v576
      %630 = vmatpush1.bf16.msra.mxu0 %v575
      %631 = vmatprep.subr.bf16.mxu0 %v574
      %632 = vmatpush1.bf16.msra.mxu0 %v573
      %633 = vmatprep.subr.bf16.mxu0 %v572
      %634 = vmatpush1.bf16.msra.mxu0 %v571
      %635 = vmatprep.subr.bf16.mxu0 %v570
      %636 = vmatpush1.bf16.msra.mxu0 %v569
      %637 = vmatprep.subr.bf16.mxu0 %v568
      %638 = vmatpush1.bf16.msra.mxu0 %v567
      %639 = vmatprep.subr.bf16.mxu0 %v566
      %640 = vmatpush1.bf16.msra.mxu0 %v565
      %641 = vmatprep.subr.bf16.mxu0 %v564
      %642 = vmatpush1.bf16.msra.mxu0 %v563
      %643 = vmatprep.subr.bf16.mxu0 %v594
      %644 = vmatpush2.bf16.msra.mxu0 %v593
      %645 = vmatprep.subr.bf16.mxu0 %v592
      %646 = vmatpush2.bf16.msra.mxu0 %v591
      %647 = vmatprep.subr.bf16.mxu0 %v590
      %648 = vmatpush2.bf16.msra.mxu0 %v589
      %649 = vmatprep.subr.bf16.mxu0 %v588
      %650 = vmatpush2.bf16.msra.mxu0 %v587
      %651 = vmatprep.subr.bf16.mxu0 %v586
      %652 = vmatpush2.bf16.msra.mxu0 %v585
      %653 = vmatprep.subr.bf16.mxu0 %v584
      %654 = vmatpush2.bf16.msra.mxu0 %v583
      %655 = vmatprep.subr.bf16.mxu0 %v582
      %656 = vmatpush2.bf16.msra.mxu0 %v581
      %657 = vmatprep.subr.bf16.mxu0 %v580
      %658 = vmatpush2.bf16.msra.mxu0 %v579
      %659 = vmatprep.mubr.bf16.mxu0 %v452
      %660 = vmatmul.mubr.bf16.gmra.mxu0 %v451
      %v661 = vpop.f32.mrf.mxu0
      %v662 = vadd.f32 0.0, %v661
      %v663 = vpop.f32.mrf.mxu0
      %v664 = vadd.f32 0.0, %v663
      %v665 = vpop.f32.mrf.mxu0
      %v666 = vadd.f32 0.0, %v665
      %v667 = vpop.f32.mrf.mxu0
      %v668 = vadd.f32 0.0, %v667
      %669 = vmatprep.mubr.bf16.mxu0 %v454
      %670 = vmatmul.mubr.bf16.gmra.mxu0 %v453
      %v671 = vpop.f32.mrf.mxu0
      %v672 = vadd.f32 0.0, %v671
      %v673 = vpop.f32.mrf.mxu0
      %v674 = vadd.f32 0.0, %v673
      %v675 = vpop.f32.mrf.mxu0
      %v676 = vadd.f32 0.0, %v675
      %v677 = vpop.f32.mrf.mxu0
      %v678 = vadd.f32 0.0, %v677
      %679 = vmatprep.mubr.bf16.mxu0 %v456
      %680 = vmatmul.mubr.bf16.gmra.mxu0 %v455
      %v681 = vpop.f32.mrf.mxu0
      %v682 = vadd.f32 0.0, %v681
      %v683 = vpop.f32.mrf.mxu0
      %v684 = vadd.f32 0.0, %v683
      %v685 = vpop.f32.mrf.mxu0
      %v686 = vadd.f32 0.0, %v685
      %v687 = vpop.f32.mrf.mxu0
      %v688 = vadd.f32 0.0, %v687
      %689 = vmatprep.mubr.bf16.mxu0 %v458
      %690 = vmatmul.mubr.bf16.gmra.mxu0 %v457
      %v691 = vpop.f32.mrf.mxu0
      %v692 = vadd.f32 0.0, %v691
      %v693 = vpop.f32.mrf.mxu0
      %v694 = vadd.f32 0.0, %v693
      %v695 = vpop.f32.mrf.mxu0
      %v696 = vadd.f32 0.0, %v695
      %v697 = vpop.f32.mrf.mxu0
      %v698 = vadd.f32 0.0, %v697
      %699 = vdwg.mxu0
      %v700 = vld [vmem:[%s277] sm:$0xf]
      %v701 = vld [vmem:[%s277 + $0x4] sm:$0xf]
      %v702 = vld [vmem:[%s277 + $0x8] sm:$0xf]
      %v703 = vld [vmem:[%s277 + $0xc] sm:$0xf]
      %v704 = vld [vmem:[%s277 + $0x10] sm:$0xf]
      %v705 = vld [vmem:[%s277 + $0x14] sm:$0xf]
      %v706 = vld [vmem:[%s277 + $0x18] sm:$0xf]
      %v707 = vld [vmem:[%s277 + $0x1c] sm:$0xf]
      %v708 = vpack.c.bf16 %v666, %v662
      %v709 = vpack.c.bf16 %v668, %v664
      %v710 = vpack.c.bf16 %v676, %v672
      %v711 = vpack.c.bf16 %v678, %v674
      %v712 = vpack.c.bf16 %v686, %v682
      %v713 = vpack.c.bf16 %v688, %v684
      %v714 = vpack.c.bf16 %v696, %v692
      %v715 = vpack.c.bf16 %v698, %v694
      %v716 = vld [vmem:[%s282] sm:$0xff]
      %v717 = vld [vmem:[%s282 + $0x8] sm:$0xff]
      %v718 = vld [vmem:[%s282 + $0x10] sm:$0xff]
      %v719 = vld [vmem:[%s282 + $0x18] sm:$0xff]
      %v720 = vld [vmem:[%s282 + $0x20] sm:$0xff]
      %v721 = vld [vmem:[%s282 + $0x28] sm:$0xff]
      %v722 = vld [vmem:[%s282 + $0x30] sm:$0xff]
      %v723 = vld [vmem:[%s282 + $0x38] sm:$0xff]
      %725 = vset.pattern.permute.xlu0 0
      %726 = vperm.xlu0 %725, %v716
      %v727 = vpop.permute.xlu0 %726
      %730 = vset.pattern.permute.xlu0 0
      %731 = vperm.xlu0 %730, %v717
      %v732 = vpop.permute.xlu0 %731
      %735 = vset.pattern.permute.xlu0 0
      %736 = vperm.xlu0 %735, %v718
      %v737 = vpop.permute.xlu0 %736
      %740 = vset.pattern.permute.xlu0 0
      %741 = vperm.xlu0 %740, %v719
      %v742 = vpop.permute.xlu0 %741
      %745 = vset.pattern.permute.xlu0 0
      %746 = vperm.xlu0 %745, %v720
      %v747 = vpop.permute.xlu0 %746
      %750 = vset.pattern.permute.xlu0 0
      %751 = vperm.xlu0 %750, %v721
      %v752 = vpop.permute.xlu0 %751
      %755 = vset.pattern.permute.xlu0 0
      %756 = vperm.xlu0 %755, %v722
      %v757 = vpop.permute.xlu0 %756
      %760 = vset.pattern.permute.xlu0 0
      %761 = vperm.xlu0 %760, %v723
      %v762 = vpop.permute.xlu0 %761
      %v772 = vunpack.c.l.b16 %v700
      %v773 = vunpack.c.l.b16 %v701
      %v774 = vunpack.c.l.b16 %v702
      %v775 = vunpack.c.l.b16 %v703
      %v776 = vunpack.c.l.b16 %v704
      %v777 = vunpack.c.l.b16 %v705
      %v778 = vunpack.c.l.b16 %v706
      %v779 = vunpack.c.l.b16 %v707
      %v780 = vpack.c.b16 %v773, %v772
      %v781 = vpack.c.b16 %v775, %v774
      %v782 = vpack.c.b16 %v777, %v776
      %v783 = vpack.c.b16 %v779, %v778
      %vm784 = vcmask 523264
      %v786 = vsel %vm784, %v780, 0
      %v789 = vsel %vm784, %v781, 0
      %v792 = vsel %vm784, %v782, 0
      %v795 = vsel %vm784, %v783, 0
      %797 = vmatprep.subr.bf16.mxu0 0
      %798 = vmatpush1.bf16.msra.mxu0 0
      %799 = vmatprep.subr.bf16.mxu0 0
      %800 = vmatpush1.bf16.msra.mxu0 0
      %801 = vmatprep.subr.bf16.mxu0 0
      %802 = vmatpush1.bf16.msra.mxu0 0
      %803 = vmatprep.subr.bf16.mxu0 0
      %804 = vmatpush1.bf16.msra.mxu0 0
      %805 = vmatprep.subr.bf16.mxu0 %v715
      %806 = vmatpush1.bf16.msra.mxu0 %v714
      %807 = vmatprep.subr.bf16.mxu0 %v713
      %808 = vmatpush1.bf16.msra.mxu0 %v712
      %809 = vmatprep.subr.bf16.mxu0 %v711
      %810 = vmatpush1.bf16.msra.mxu0 %v710
      %811 = vmatprep.subr.bf16.mxu0 %v709
      %812 = vmatpush1.bf16.msra.mxu0 %v708
      %813 = vmatprep.subr.bf16.mxu0 0
      %814 = vmatpush2.bf16.msra.mxu0 0
      %815 = vmatprep.subr.bf16.mxu0 0
      %816 = vmatpush2.bf16.msra.mxu0 0
      %817 = vmatprep.subr.bf16.mxu0 0
      %818 = vmatpush2.bf16.msra.mxu0 0
      %819 = vmatprep.subr.bf16.mxu0 0
      %820 = vmatpush2.bf16.msra.mxu0 0
      %821 = vmatprep.subr.bf16.mxu0 0
      %822 = vmatpush2.bf16.msra.mxu0 0
      %823 = vmatprep.subr.bf16.mxu0 0
      %824 = vmatpush2.bf16.msra.mxu0 0
      %825 = vmatprep.subr.bf16.mxu0 0
      %826 = vmatpush2.bf16.msra.mxu0 0
      %827 = vmatprep.subr.bf16.mxu0 0
      %828 = vmatpush2.bf16.msra.mxu0 0
      %829 = vmatprep.mubr.bf16.mxu0 0
      %830 = vmatmul.mubr.bf16.gmra.mxu0 %v786
      %v831 = vpop.f32.mrf.mxu0
      %v832 = vadd.f32 %v727, %v831
      %v833 = vpop.f32.mrf.mxu0
      %v834 = vadd.f32 %v727, %v833
      %v835 = vpop.f32.mrf.mxu0
      %v836 = vadd.f32 %v732, %v835
      %v837 = vpop.f32.mrf.mxu0
      %v838 = vadd.f32 %v732, %v837
      %839 = vmatprep.mubr.bf16.mxu0 0
      %840 = vmatmul.mubr.bf16.gmra.mxu0 %v789
      %v841 = vpop.f32.mrf.mxu0
      %v842 = vadd.f32 %v737, %v841
      %v843 = vpop.f32.mrf.mxu0
      %v844 = vadd.f32 %v737, %v843
      %v845 = vpop.f32.mrf.mxu0
      %v846 = vadd.f32 %v742, %v845
      %v847 = vpop.f32.mrf.mxu0
      %v848 = vadd.f32 %v742, %v847
      %849 = vmatprep.mubr.bf16.mxu0 0
      %850 = vmatmul.mubr.bf16.gmra.mxu0 %v792
      %v851 = vpop.f32.mrf.mxu0
      %v852 = vadd.f32 %v747, %v851
      %v853 = vpop.f32.mrf.mxu0
      %v854 = vadd.f32 %v747, %v853
      %v855 = vpop.f32.mrf.mxu0
      %v856 = vadd.f32 %v752, %v855
      %v857 = vpop.f32.mrf.mxu0
      %v858 = vadd.f32 %v752, %v857
      %859 = vmatprep.mubr.bf16.mxu0 0
      %860 = vmatmul.mubr.bf16.gmra.mxu0 %v795
      %v861 = vpop.f32.mrf.mxu0
      %v862 = vadd.f32 %v757, %v861
      %v863 = vpop.f32.mrf.mxu0
      %v864 = vadd.f32 %v757, %v863
      %v865 = vpop.f32.mrf.mxu0
      %v866 = vadd.f32 %v762, %v865
      %v867 = vpop.f32.mrf.mxu0
      %v868 = vadd.f32 %v762, %v867
      %869 = vdwg.mxu0
      %v870 = vtanh.pop %v832
      %v871 = vtanh.pop %v834
      %v872 = vtanh.pop %v836
      %v873 = vtanh.pop %v838
      %v874 = vtanh.pop %v842
      %v875 = vtanh.pop %v844
      %v876 = vtanh.pop %v846
      %v877 = vtanh.pop %v848
      %v878 = vtanh.pop %v852
      %v879 = vtanh.pop %v854
      %v880 = vtanh.pop %v856
      %v881 = vtanh.pop %v858
      %v882 = vtanh.pop %v862
      %v883 = vtanh.pop %v864
      %v884 = vtanh.pop %v866
      %v885 = vtanh.pop %v868
      %v886 = vld [vmem:[%s287] sm:$0xf]
      %v887 = vld [vmem:[%s287 + $0x4] sm:$0xf]
      %v888 = vld [vmem:[%s287 + $0x8] sm:$0xf]
      %v889 = vld [vmem:[%s287 + $0xc] sm:$0xf]
      %v890 = vld [vmem:[%s287 + $0x10] sm:$0xf]
      %v891 = vld [vmem:[%s287 + $0x14] sm:$0xf]
      %v892 = vld [vmem:[%s287 + $0x18] sm:$0xf]
      %v893 = vld [vmem:[%s287 + $0x1c] sm:$0xf]
      %v894 = vpack.c.bf16 %v872, %v870
      %v895 = vpack.c.bf16 %v873, %v871
      %v896 = vpack.c.bf16 %v876, %v874
      %v897 = vpack.c.bf16 %v877, %v875
      %v898 = vpack.c.bf16 %v880, %v878
      %v899 = vpack.c.bf16 %v881, %v879
      %v900 = vpack.c.bf16 %v884, %v882
      %v901 = vpack.c.bf16 %v885, %v883
      %v902 = vld [vmem:[%s292] sm:$0xff]
      %v903 = vld [vmem:[%s292 + $0x8] sm:$0xff]
      %v904 = vld [vmem:[%s292 + $0x10] sm:$0xff]
      %v905 = vld [vmem:[%s292 + $0x18] sm:$0xff]
      %v906 = vld [vmem:[%s292 + $0x20] sm:$0xff]
      %v907 = vld [vmem:[%s292 + $0x28] sm:$0xff]
      %v908 = vld [vmem:[%s292 + $0x30] sm:$0xff]
      %v909 = vld [vmem:[%s292 + $0x38] sm:$0xff]
      %911 = vset.pattern.permute.xlu0 0
      %912 = vperm.xlu0 %911, %v902
      %v913 = vpop.permute.xlu0 %912
      %916 = vset.pattern.permute.xlu0 0
      %917 = vperm.xlu0 %916, %v903
      %v918 = vpop.permute.xlu0 %917
      %921 = vset.pattern.permute.xlu0 0
      %922 = vperm.xlu0 %921, %v904
      %v923 = vpop.permute.xlu0 %922
      %926 = vset.pattern.permute.xlu0 0
      %927 = vperm.xlu0 %926, %v905
      %v928 = vpop.permute.xlu0 %927
      %931 = vset.pattern.permute.xlu0 0
      %932 = vperm.xlu0 %931, %v906
      %v933 = vpop.permute.xlu0 %932
      %936 = vset.pattern.permute.xlu0 0
      %937 = vperm.xlu0 %936, %v907
      %v938 = vpop.permute.xlu0 %937
      %941 = vset.pattern.permute.xlu0 0
      %942 = vperm.xlu0 %941, %v908
      %v943 = vpop.permute.xlu0 %942
      %946 = vset.pattern.permute.xlu0 0
      %947 = vperm.xlu0 %946, %v909
      %v948 = vpop.permute.xlu0 %947
      %v958 = vunpack.c.l.b16 %v886
      %v959 = vunpack.c.l.b16 %v887
      %v960 = vunpack.c.l.b16 %v888
      %v961 = vunpack.c.l.b16 %v889
      %v962 = vunpack.c.l.b16 %v890
      %v963 = vunpack.c.l.b16 %v891
      %v964 = vunpack.c.l.b16 %v892
      %v965 = vunpack.c.l.b16 %v893
      %v966 = vpack.c.b16 %v959, %v958
      %v967 = vpack.c.b16 %v961, %v960
      %v968 = vpack.c.b16 %v963, %v962
      %v969 = vpack.c.b16 %v965, %v964
      %v971 = vsel %vm784, %v966, 0
      %v974 = vsel %vm784, %v967, 0
      %v977 = vsel %vm784, %v968, 0
      %v980 = vsel %vm784, %v969, 0
      %982 = vmatprep.subr.bf16.mxu0 0
      %983 = vmatpush1.bf16.msra.mxu0 0
      %984 = vmatprep.subr.bf16.mxu0 0
      %985 = vmatpush1.bf16.msra.mxu0 0
      %986 = vmatprep.subr.bf16.mxu0 0
      %987 = vmatpush1.bf16.msra.mxu0 0
      %988 = vmatprep.subr.bf16.mxu0 0
      %989 = vmatpush1.bf16.msra.mxu0 0
      %990 = vmatprep.subr.bf16.mxu0 %v901
      %991 = vmatpush1.bf16.msra.mxu0 %v900
      %992 = vmatprep.subr.bf16.mxu0 %v899
      %993 = vmatpush1.bf16.msra.mxu0 %v898
      %994 = vmatprep.subr.bf16.mxu0 %v897
      %995 = vmatpush1.bf16.msra.mxu0 %v896
      %996 = vmatprep.subr.bf16.mxu0 %v895
      %997 = vmatpush1.bf16.msra.mxu0 %v894
      %998 = vmatprep.subr.bf16.mxu0 0
      %999 = vmatpush2.bf16.msra.mxu0 0
      %1000 = vmatprep.subr.bf16.mxu0 0
      %1001 = vmatpush2.bf16.msra.mxu0 0
      %1002 = vmatprep.subr.bf16.mxu0 0
      %1003 = vmatpush2.bf16.msra.mxu0 0
      %1004 = vmatprep.subr.bf16.mxu0 0
      %1005 = vmatpush2.bf16.msra.mxu0 0
      %1006 = vmatprep.subr.bf16.mxu0 0
      %1007 = vmatpush2.bf16.msra.mxu0 0
      %1008 = vmatprep.subr.bf16.mxu0 0
      %1009 = vmatpush2.bf16.msra.mxu0 0
      %1010 = vmatprep.subr.bf16.mxu0 0
      %1011 = vmatpush2.bf16.msra.mxu0 0
      %1012 = vmatprep.subr.bf16.mxu0 0
      %1013 = vmatpush2.bf16.msra.mxu0 0
      %1014 = vmatprep.mubr.bf16.mxu0 0
      %1015 = vmatmul.mubr.bf16.gmra.mxu0 %v971
      %v1016 = vpop.f32.mrf.mxu0
      %v1017 = vadd.f32 %v913, %v1016
      %v1018 = vpop.f32.mrf.mxu0
      %v1019 = vadd.f32 %v913, %v1018
      %v1020 = vpop.f32.mrf.mxu0
      %v1021 = vadd.f32 %v918, %v1020
      %v1022 = vpop.f32.mrf.mxu0
      %v1023 = vadd.f32 %v918, %v1022
      %1024 = vmatprep.mubr.bf16.mxu0 0
      %1025 = vmatmul.mubr.bf16.gmra.mxu0 %v974
      %v1026 = vpop.f32.mrf.mxu0
      %v1027 = vadd.f32 %v923, %v1026
      %v1028 = vpop.f32.mrf.mxu0
      %v1029 = vadd.f32 %v923, %v1028
      %v1030 = vpop.f32.mrf.mxu0
      %v1031 = vadd.f32 %v928, %v1030
      %v1032 = vpop.f32.mrf.mxu0
      %v1033 = vadd.f32 %v928, %v1032
      %1034 = vmatprep.mubr.bf16.mxu0 0
      %1035 = vmatmul.mubr.bf16.gmra.mxu0 %v977
      %v1036 = vpop.f32.mrf.mxu0
      %v1037 = vadd.f32 %v933, %v1036
      %v1038 = vpop.f32.mrf.mxu0
      %v1039 = vadd.f32 %v933, %v1038
      %v1040 = vpop.f32.mrf.mxu0
      %v1041 = vadd.f32 %v938, %v1040
      %v1042 = vpop.f32.mrf.mxu0
      %v1043 = vadd.f32 %v938, %v1042
      %1044 = vmatprep.mubr.bf16.mxu0 0
      %1045 = vmatmul.mubr.bf16.gmra.mxu0 %v980
      %v1046 = vpop.f32.mrf.mxu0
      %v1047 = vadd.f32 %v943, %v1046
      %v1048 = vpop.f32.mrf.mxu0
      %v1049 = vadd.f32 %v943, %v1048
      %v1050 = vpop.f32.mrf.mxu0
      %v1051 = vadd.f32 %v948, %v1050
      %v1052 = vpop.f32.mrf.mxu0
      %v1053 = vadd.f32 %v948, %v1052
      %1054 = vdwg.mxu0
      %1055 = vst [vmem:[%s297] sm:$0xff] %v1017
      %1056 = vst [vmem:[%s297 + $0x8] sm:$0xff] %v1019
      %1057 = vst [vmem:[%s297 + $0x10] sm:$0xff] %v1021
      %1058 = vst [vmem:[%s297 + $0x18] sm:$0xff] %v1023
      %1059 = vst [vmem:[%s297 + $0x20] sm:$0xff] %v1027
      %1060 = vst [vmem:[%s297 + $0x28] sm:$0xff] %v1029
      %1061 = vst [vmem:[%s297 + $0x30] sm:$0xff] %v1031
      %1062 = vst [vmem:[%s297 + $0x38] sm:$0xff] %v1033
      %1063 = vst [vmem:[%s297 + $0x40] sm:$0xff] %v1037
      %1064 = vst [vmem:[%s297 + $0x48] sm:$0xff] %v1039
      %1065 = vst [vmem:[%s297 + $0x50] sm:$0xff] %v1041
      %1066 = vst [vmem:[%s297 + $0x58] sm:$0xff] %v1043
      %1067 = vst [vmem:[%s297 + $0x60] sm:$0xff] %v1047
      %1068 = vst [vmem:[%s297 + $0x68] sm:$0xff] %v1049
      %1069 = vst [vmem:[%s297 + $0x70] sm:$0xff] %v1051
      %1070 = vst [vmem:[%s297 + $0x78] sm:$0xff] %v1053
      %v1071 = vpack.c.bf16 %v1021, %v1017
      %v1072 = vpack.c.bf16 %v1023, %v1019
      %v1073 = vpack.c.bf16 %v1031, %v1027
      %v1074 = vpack.c.bf16 %v1033, %v1029
      %v1075 = vpack.c.bf16 %v1041, %v1037
      %v1076 = vpack.c.bf16 %v1043, %v1039
      %v1077 = vpack.c.bf16 %v1051, %v1047
      %v1078 = vpack.c.bf16 %v1053, %v1049
      %s1079 = ssub.s32 1, %s378
      %v1088 = vunpack.c.l.b16 %v1071
      %v1089 = vunpack.c.l.b16 %v1072
      %v1090 = vunpack.c.h.b16 %v1071
      %v1091 = vunpack.c.h.b16 %v1072
      %v1092 = vunpack.c.l.b16 %v1073
      %v1093 = vunpack.c.l.b16 %v1074
      %v1094 = vunpack.c.h.b16 %v1073
      %v1095 = vunpack.c.h.b16 %v1074
      %v1096 = vunpack.c.l.b16 %v1075
      %v1097 = vunpack.c.l.b16 %v1076
      %v1098 = vunpack.c.h.b16 %v1075
      %v1099 = vunpack.c.h.b16 %v1076
      %v1100 = vunpack.c.l.b16 %v1077
      %v1101 = vunpack.c.l.b16 %v1078
      %v1102 = vunpack.c.h.b16 %v1077
      %v1103 = vunpack.c.h.b16 %v1078
      %v1104 = vpack.c.b16 %v1089, %v1088
      %v1105 = vpack.c.b16 %v1091, %v1090
      %v1106 = vpack.c.b16 %v1093, %v1092
      %v1107 = vpack.c.b16 %v1095, %v1094
      %v1108 = vpack.c.b16 %v1097, %v1096
      %v1109 = vpack.c.b16 %v1099, %v1098
      %v1110 = vpack.c.b16 %v1101, %v1100
      %v1111 = vpack.c.b16 %v1103, %v1102
      %s1120 = smul.u32 %s1079, 16
      %s1121 = sadd.s32 %s391, %s1120
      %s1122 = smul.addr %s1121, 4
      %s1123 = scalar_lea.vmem [#allocation2], %s1122
      %1124 = vst [vmem:[%s1123] sm:$0xff] %v1104
      %1125 = vst [vmem:[%s1123 + $0x8] sm:$0xff] %v1105
      %1126 = vst [vmem:[%s1123 + $0x10] sm:$0xff] %v1106
      %1127 = vst [vmem:[%s1123 + $0x18] sm:$0xff] %v1107
      %1128 = vst [vmem:[%s1123 + $0x20] sm:$0xff] %v1108
      %1129 = vst [vmem:[%s1123 + $0x28] sm:$0xff] %v1109
      %1130 = vst [vmem:[%s1123 + $0x30] sm:$0xff] %v1110
      %1131 = vst [vmem:[%s1123 + $0x38] sm:$0xff] %v1111
      %s1132 = smul.u32 2, %s22
      %p1133 = scmp.lt.s32.totalorder %s1132, 1
      %s1134 = scalar_select %p1133, %s1132, 1
      %s1135 = smul.addr %s1134, 8
      %s1136 = scalar_lea.vmem %s6, %s1135
      // Predicated region
      $region79: #{gin_module_forward.1} parent=39 // pred_check
        %p1137 = pneg %p172
      $region80: #{gin_module_forward.1} parent=39 // pred_check_branch
        %1139 = sbr.rel (%p1137) target = $region82
      $region81: #{gin_module_forward.1} parent=39 // pred_region
        %s1140 = smul.u32 2, %s22
      $region82: #{gin_module_forward.1} parent=39 // pred_fallthru
        _
      // Predicated region
      $region83: #{gin_module_forward.1} parent=39 // pred_check
        %p1141 = pneg %p172
      $region84: #{gin_module_forward.1} parent=39 // pred_check_branch
        %1143 = sbr.rel (%p1141) target = $region86
      $region85: #{gin_module_forward.1} parent=39 // pred_region
        %s1144 = smul.u32 2, %s22
        %p1145 = scmp.lt.s32.totalorder %s1144, 1
        %s1146 = scalar_select %p1145, %s1144, 1
        %s1147 = smul.addr %s1146, 8
        %s1148 = scalar_lea.vmem %s6, %s1147
      $region86: #{gin_module_forward.1} parent=39 // pred_fallthru
        _
    $region40: #{gin_module_forward.1} parent=5 // pred_fallthru
      _
    %p1149 = scmp.le.s32.totalorder 2, %s12
    // Predicated region
    $region87: #{gin_module_forward.1} parent=5 // pred_check
      %p1150 = pneg %p1149
    $region88: #{gin_module_forward.1} parent=5 // pred_check_branch
      %1152 = sbr.rel (%p1150) target = $region90
    $region89: #{gin_module_forward.1} parent=5 // pred_region
      %s1153 = ssub.s32 %s12, 2
    $region90: #{gin_module_forward.1} parent=5 // pred_fallthru
      _
  $region6: #{gin_module_forward.1} parent=0 // loop_footer
    %s16 = sadd.s32 1, %s12
  $region7: #{gin_module_forward.1} parent=0 // loop_footer_branch
    %11 = sbr.rel target = $region3
  $region8: #{gin_module_forward.1} parent=0 // loop_exit
    _
  %1154 = vsyncmov [#allocation3]
  %s1155 = vpop.sfrf %1154
  %p1156 = scmp.eq.s32.totalorder %s1155, 0
  %p1157 = pneg %p1156
  %1159 = shalt.err (%p1157)

</llo_original>
